<compile_context>
chip_gen: v7x
topology: tpu7x:2x2x1
jax: 0.10.0
libtpu: 0.0.40
codegen_flags: <defaults>
</compile_context>

<pallas_src>
import functools
import jax
import jax.numpy as jnp
from jax import lax
from jax.experimental import pallas as pl
from jax.experimental.pallas import tpu as pltpu

EPS = 1e-5  # BatchNorm1d default eps


def _round_up(v, m):
    return ((v + m - 1) // m) * m


def _discrete2_kernel(x_ref, w_ref, probs_ref, loss_ref,
                      *, dim, d_in, h1, h2, d_out, off2, off3, voff):
    n = x_ref.shape[0]
    x = x_ref[...].astype(jnp.float32)                 # (N, D_in+1); col `dim` = label

    # ---- single packed slab (one resident DMA); offsets are 8-row aligned ----
    w1 = w_ref[0:d_in + 1, 0:h1]                       # row `dim` is all-zero
    w2 = w_ref[off2:off2 + h1, 0:h2]
    w3 = w_ref[off3:off3 + h2, 0:d_out]
    b1 = w_ref[voff + 0:voff + 1, 0:h1]
    g1 = w_ref[voff + 1:voff + 2, 0:h1]
    be1 = w_ref[voff + 2:voff + 3, 0:h1]
    b2 = w_ref[voff + 3:voff + 4, 0:h2]
    g2 = w_ref[voff + 4:voff + 5, 0:h2]
    be2 = w_ref[voff + 5:voff + 6, 0:h2]
    b3 = w_ref[voff + 6:voff + 7, 0:d_out]

    def lin_bn_relu(a, w, b, g, be):
        h = jnp.dot(a, w, preferred_element_type=jnp.float32) + b
        mu = jnp.mean(h, axis=0, keepdims=True)        # (1, H)
        c = h - mu
        var = jnp.mean(c * c, axis=0, keepdims=True)   # biased var (BN train mode)
        scale = g * lax.rsqrt(var + EPS)               # fused affine on (1, H) row
        return jnp.maximum(c * scale + be, 0.0)        # single (N, H) mul-add + relu

    h = lin_bn_relu(x, w1, b1, g1, be1)                # linear1 + bn1 + relu
    h = lin_bn_relu(h, w2, b2, g2, be2)                # linear2 + bn2 + relu

    logits = jnp.dot(h, w3, preferred_element_type=jnp.float32) + b3   # (N, D_out)

    # ---- softmax probs (Categorical parameterization) ----
    m = jnp.max(logits, axis=1, keepdims=True)
    e = jnp.exp(logits - m)
    s = jnp.sum(e, axis=1, keepdims=True)
    inv_s = pl.reciprocal(s, approx=False)             # EUP, not a VALU divide
    probs_ref[...] = (e * inv_s).astype(probs_ref.dtype)

    # ---- cross-entropy loss (mean reduction) -> one (8,128) tile per problem ----
    lse = m + jnp.log(s)                               # (N, 1)
    y = x[:, dim:dim + 1].astype(jnp.int32)            # (N, 1) integer targets
    col = lax.broadcasted_iota(jnp.int32, (n, d_out), 1)
    picked = jnp.sum(jnp.where(col == y, logits, 0.0), axis=1, keepdims=True)
    loss = jnp.sum(lse - picked) * (1.0 / n)
    loss_ref[...] = jnp.broadcast_to(loss, loss_ref.shape)


def pack_params(params, d_in, h1, h2, d_out, dim):
    """Pack the 12 small parameter arrays into ONE slab (w1|w2|w3|vec-pack).
    This is the canonical stored representation -- build it once, off the hot
    path."""
    ncols = max(h1, h2, d_out)
    off2 = _round_up(d_in + 1, 8)
    off3 = off2 + _round_up(h1, 8)
    voff = off3 + _round_up(h2, 8)
    nrows = voff + 8

    # w1 extended with a zero row at `dim` so the label column of x is ignored.
    w1_ext = jnp.zeros((d_in + 1, h1), jnp.float32)
    w1_ext = w1_ext.at[:dim, :].set(params["w1"][:dim, :])
    w1_ext = w1_ext.at[dim + 1:, :].set(params["w1"][dim:, :])

    slab = jnp.zeros((nrows, ncols), jnp.float32)
    slab = slab.at[0:d_in + 1, 0:h1].set(w1_ext)
    slab = slab.at[off2:off2 + h1, 0:h2].set(params["w2"])
    slab = slab.at[off3:off3 + h2, 0:d_out].set(params["w3"])
    slab = slab.at[voff + 0, 0:h1].set(params["b1"][0])
    slab = slab.at[voff + 1, 0:h1].set(params["g1"][0])
    slab = slab.at[voff + 2, 0:h1].set(params["be1"][0])
    slab = slab.at[voff + 3, 0:h2].set(params["b2"][0])
    slab = slab.at[voff + 4, 0:h2].set(params["g2"][0])
    slab = slab.at[voff + 5, 0:h2].set(params["be2"][0])
    slab = slab.at[voff + 6, 0:d_out].set(params["b3"][0])
    return slab, dict(off2=off2, off3=off3, voff=voff)


def discrete2_forward(xb, slab, *, dim, d_in, h1, h2, d_out, n,
                      off2, off3, voff):
    """Batched forward: xb is (B, N, D_in+1) -- B independent Discrete2 problems.
    Returns (probs (B,N,D_out), loss (B,)) matching Discrete2.forward per problem
    (probs parameterize the Categorical; loss is the mean cross-entropy)."""
    b = xb.shape[0]
    c = d_in + 1
    x_flat = xb.reshape(b * n, c)
    nrows, ncols = slab.shape

    flops = 2 * b * n * (d_in * h1 + h1 * h2 + h2 * d_out)
    transcendentals = b * (n * d_out + n + h1 + h2)
    bytes_accessed = 4 * (x_flat.size + slab.size + b * n * d_out + b * 8 * 128)

    kernel = pl.pallas_call(
        functools.partial(_discrete2_kernel, dim=dim, d_in=d_in, h1=h1, h2=h2,
                          d_out=d_out, off2=off2, off3=off3, voff=voff),
        grid=(b,),
        out_shape=(
            jax.ShapeDtypeStruct((b * n, d_out), jnp.float32),   # probs (flat)
            jax.ShapeDtypeStruct((b * 8, 128), jnp.float32),     # loss tiles
        ),
        in_specs=[
            pl.BlockSpec((n, c), lambda i: (i, 0)),              # per-problem x
            pl.BlockSpec((nrows, ncols), lambda i: (0, 0)),      # resident slab
        ],
        out_specs=(
            pl.BlockSpec((n, d_out), lambda i: (i, 0)),
            pl.BlockSpec((8, 128), lambda i: (i, 0)),
        ),
        compiler_params=pltpu.CompilerParams(
            dimension_semantics=("parallel",)),
        cost_estimate=pl.CostEstimate(flops=flops,
                                      transcendentals=transcendentals,
                                      bytes_accessed=bytes_accessed),
    )
    probs_flat, loss_tiles = kernel(x_flat, slab)
    probs = probs_flat.reshape(b, n, d_out)
    loss = loss_tiles.reshape(b, 8 * 128)[:, 0]
    return probs, loss


def init_params(key, d_in, h1, h2, d_out):
    """PyTorch-default Linear init (U(-1/sqrt(fan_in), 1/sqrt(fan_in))),
    BatchNorm gamma=1 / beta=0."""
    ks = jax.random.split(key, 6)

    def lin(kw, kb, fan_in, fan_out):
        bound = 1.0 / jnp.sqrt(fan_in)
        w = jax.random.uniform(kw, (fan_in, fan_out), jnp.float32, -bound, bound)
        b = jax.random.uniform(kb, (1, fan_out), jnp.float32, -bound, bound)
        return w, b

    w1, b1 = lin(ks[0], ks[1], d_in, h1)
    w2, b2 = lin(ks[2], ks[3], h1, h2)
    w3, b3 = lin(ks[4], ks[5], h2, d_out)
    return dict(
        w1=w1, b1=b1, g1=jnp.ones((1, h1), jnp.float32), be1=jnp.zeros((1, h1), jnp.float32),
        w2=w2, b2=b2, g2=jnp.ones((1, h2), jnp.float32), be2=jnp.zeros((1, h2), jnp.float32),
        w3=w3, b3=b3,
    )


def _reference(x, params, dim):
    n, c = x.shape
    y = x[:, dim].astype(jnp.int32)
    keep = jnp.array([i for i in range(c) if i != dim], dtype=jnp.int32)
    h = x[:, keep]

    def bn(h):
        mu = jnp.mean(h, axis=0, keepdims=True)
        var = jnp.mean((h - mu) ** 2, axis=0, keepdims=True)
        return (h - mu) / jnp.sqrt(var + EPS)

    h = jax.nn.relu(bn(h @ params["w1"] + params["b1"]) * params["g1"] + params["be1"])
    h = jax.nn.relu(bn(h @ params["w2"] + params["b2"]) * params["g2"] + params["be2"])
    logits = h @ params["w3"] + params["b3"]
    probs = jax.nn.softmax(logits, axis=1)
    logp = jax.nn.log_softmax(logits, axis=1)
    loss = -jnp.mean(logp[jnp.arange(n), y])
    return probs, loss


if __name__ == "__main__":
    # Module hyperparameters: D_in=8, H1=32, H2=32, D_out=4, dim=3
    D_in, H1, H2, D_out, dim = 8, 32, 32, 4, 3
    N, B = 16, 4   # N rows per problem, B independent problems in one launch

    key = jax.random.PRNGKey(0)
    k_feat, k_lbl, k_param = jax.random.split(key, 3)

    # Build inputs: (B, N, D_in + 1) with column `dim` holding integer class labels.
    feats = jax.random.normal(k_feat, (B, N, D_in), jnp.float32)
    labels = jax.random.randint(k_lbl, (B, N), 0, D_out).astype(jnp.float32)
    xb = jnp.concatenate(
        [feats[..., :dim], labels[..., None], feats[..., dim:]], axis=-1
    )  # (B, N, D_in + 1)

    params = init_params(k_param, D_in, H1, H2, D_out)
    slab, offs = pack_params(params, D_in, H1, H2, D_out, dim)  # once, off the hot path
    slab = jax.block_until_ready(slab)

    probs, loss = discrete2_forward(
        xb, slab, dim=dim, d_in=D_in, h1=H1, h2=H2, d_out=D_out, n=N, **offs)
    jax.block_until_ready((probs, loss))

    for b in range(B):
        ref_probs, ref_loss = _reference(xb[b], params, dim)
        assert jnp.allclose(probs[b], ref_probs, atol=1e-5, rtol=1e-5)
        assert jnp.allclose(loss[b], ref_loss, atol=1e-5, rtol=1e-5)

    print("KERNEL_OK")
</pallas_src>

<mosaic_0001>
module attributes {stable_mosaic.version = 11 : i64} {
  func.func @_discrete2_kernel(%arg0: i32, %arg1: memref<16x9xf32, #tpu.memory_space<vmem>>, %arg2: memref<88x32xf32, #tpu.memory_space<vmem>>, %arg3: memref<16x4xf32, #tpu.memory_space<vmem>>, %arg4: memref<8x128xf32, #tpu.memory_space<vmem>>) attributes {dimension_semantics = [#tpu.dimension_semantics<parallel>], iteration_bounds = array<i64: 4>, scalar_prefetch = 0 : i64, scratch_operands = 0 : i64, tpu.core_type = #tpu.core_type<tc>, window_params = [{transform_indices = @transform_0, window_bounds = array<i64: 16, 9>}, {pipeline_mode = #tpu.pipeline_mode<synchronous>, transform_indices = @transform_1, window_bounds = array<i64: 88, 32>}, {transform_indices = @transform_2, window_bounds = array<i64: 16, 4>}, {transform_indices = @transform_3, window_bounds = array<i64: 8, 128>}]} {
    %c0 = arith.constant 0 : index
    %c0_0 = arith.constant 0 : index
    %0 = vector.load %arg1[%c0, %c0_0] : memref<16x9xf32, #tpu.memory_space<vmem>>, vector<16x9xf32>
    %c0_1 = arith.constant 0 : index
    %c0_2 = arith.constant 0 : index
    %1 = vector.load %arg2[%c0_1, %c0_2] : memref<88x32xf32, #tpu.memory_space<vmem>>, vector<9x32xf32>
    %c16 = arith.constant 16 : index
    %c0_3 = arith.constant 0 : index
    %2 = vector.load %arg2[%c16, %c0_3] : memref<88x32xf32, #tpu.memory_space<vmem>>, vector<32x32xf32>
    %c48 = arith.constant 48 : index
    %c0_4 = arith.constant 0 : index
    %3 = vector.load %arg2[%c48, %c0_4] : memref<88x32xf32, #tpu.memory_space<vmem>>, vector<32x4xf32>
    %c80 = arith.constant 80 : index
    %c0_5 = arith.constant 0 : index
    %4 = vector.load %arg2[%c80, %c0_5] : memref<88x32xf32, #tpu.memory_space<vmem>>, vector<1x32xf32>
    %c81 = arith.constant 81 : index
    %c0_6 = arith.constant 0 : index
    %5 = vector.load %arg2[%c81, %c0_6] : memref<88x32xf32, #tpu.memory_space<vmem>>, vector<1x32xf32>
    %c82 = arith.constant 82 : index
    %c0_7 = arith.constant 0 : index
    %6 = vector.load %arg2[%c82, %c0_7] : memref<88x32xf32, #tpu.memory_space<vmem>>, vector<1x32xf32>
    %c83 = arith.constant 83 : index
    %c0_8 = arith.constant 0 : index
    %7 = vector.load %arg2[%c83, %c0_8] : memref<88x32xf32, #tpu.memory_space<vmem>>, vector<1x32xf32>
    %c84 = arith.constant 84 : index
    %c0_9 = arith.constant 0 : index
    %8 = vector.load %arg2[%c84, %c0_9] : memref<88x32xf32, #tpu.memory_space<vmem>>, vector<1x32xf32>
    %c85 = arith.constant 85 : index
    %c0_10 = arith.constant 0 : index
    %9 = vector.load %arg2[%c85, %c0_10] : memref<88x32xf32, #tpu.memory_space<vmem>>, vector<1x32xf32>
    %c86 = arith.constant 86 : index
    %c0_11 = arith.constant 0 : index
    %10 = vector.load %arg2[%c86, %c0_11] : memref<88x32xf32, #tpu.memory_space<vmem>>, vector<1x4xf32>
    %cst = arith.constant dense<0.000000e+00> : vector<16x32xf32>
    %11 = tpu.matmul %0, %1, %cst {dimension_numbers = #tpu.dot_dimension_numbers<[1], [0], [0], [1], [0, 0, 1, 1], [], []>} : vector<16x9xf32>, vector<9x32xf32>, vector<16x32xf32> -> vector<16x32xf32>
    %12 = vector.broadcast %4 : vector<1x32xf32> to vector<16x32xf32>
    %13 = arith.addf %11, %12 : vector<16x32xf32>
    %cst_12 = arith.constant dense<0.000000e+00> : vector<32xf32>
    %14 = vector.multi_reduction <add>, %13, %cst_12 [0] : vector<16x32xf32> to vector<32xf32>
    %15 = vector.shape_cast %14 : vector<32xf32> to vector<1x32xf32>
    %cst_13 = arith.constant 1.600000e+01 : f32
    %16 = vector.broadcast %cst_13 : f32 to vector<1x32xf32>
    %17 = arith.divf %15, %16 : vector<1x32xf32>
    %18 = vector.broadcast %17 : vector<1x32xf32> to vector<16x32xf32>
    %19 = arith.subf %13, %18 : vector<16x32xf32>
    %20 = arith.mulf %19, %19 : vector<16x32xf32>
    %cst_14 = arith.constant dense<0.000000e+00> : vector<32xf32>
    %21 = vector.multi_reduction <add>, %20, %cst_14 [0] : vector<16x32xf32> to vector<32xf32>
    %22 = vector.shape_cast %21 : vector<32xf32> to vector<1x32xf32>
    %cst_15 = arith.constant 1.600000e+01 : f32
    %23 = vector.broadcast %cst_15 : f32 to vector<1x32xf32>
    %24 = arith.divf %22, %23 : vector<1x32xf32>
    %cst_16 = arith.constant 9.99999974E-6 : f32
    %25 = vector.broadcast %cst_16 : f32 to vector<1x32xf32>
    %26 = arith.addf %24, %25 : vector<1x32xf32>
    %27 = math.rsqrt %26 : vector<1x32xf32>
    %28 = arith.mulf %5, %27 : vector<1x32xf32>
    %29 = vector.broadcast %28 : vector<1x32xf32> to vector<16x32xf32>
    %30 = arith.mulf %19, %29 : vector<16x32xf32>
    %31 = vector.broadcast %6 : vector<1x32xf32> to vector<16x32xf32>
    %32 = arith.addf %30, %31 : vector<16x32xf32>
    %cst_17 = arith.constant 0.000000e+00 : f32
    %33 = vector.broadcast %cst_17 : f32 to vector<16x32xf32>
    %34 = arith.maximumf %32, %33 : vector<16x32xf32>
    %cst_18 = arith.constant dense<0.000000e+00> : vector<16x32xf32>
    %35 = tpu.matmul %34, %2, %cst_18 {dimension_numbers = #tpu.dot_dimension_numbers<[1], [0], [0], [1], [0, 0, 1, 1], [], []>} : vector<16x32xf32>, vector<32x32xf32>, vector<16x32xf32> -> vector<16x32xf32>
    %36 = vector.broadcast %7 : vector<1x32xf32> to vector<16x32xf32>
    %37 = arith.addf %35, %36 : vector<16x32xf32>
    %cst_19 = arith.constant dense<0.000000e+00> : vector<32xf32>
    %38 = vector.multi_reduction <add>, %37, %cst_19 [0] : vector<16x32xf32> to vector<32xf32>
    %39 = vector.shape_cast %38 : vector<32xf32> to vector<1x32xf32>
    %cst_20 = arith.constant 1.600000e+01 : f32
    %40 = vector.broadcast %cst_20 : f32 to vector<1x32xf32>
    %41 = arith.divf %39, %40 : vector<1x32xf32>
    %42 = vector.broadcast %41 : vector<1x32xf32> to vector<16x32xf32>
    %43 = arith.subf %37, %42 : vector<16x32xf32>
    %44 = arith.mulf %43, %43 : vector<16x32xf32>
    %cst_21 = arith.constant dense<0.000000e+00> : vector<32xf32>
    %45 = vector.multi_reduction <add>, %44, %cst_21 [0] : vector<16x32xf32> to vector<32xf32>
    %46 = vector.shape_cast %45 : vector<32xf32> to vector<1x32xf32>
    %cst_22 = arith.constant 1.600000e+01 : f32
    %47 = vector.broadcast %cst_22 : f32 to vector<1x32xf32>
    %48 = arith.divf %46, %47 : vector<1x32xf32>
    %cst_23 = arith.constant 9.99999974E-6 : f32
    %49 = vector.broadcast %cst_23 : f32 to vector<1x32xf32>
    %50 = arith.addf %48, %49 : vector<1x32xf32>
    %51 = math.rsqrt %50 : vector<1x32xf32>
    %52 = arith.mulf %8, %51 : vector<1x32xf32>
    %53 = vector.broadcast %52 : vector<1x32xf32> to vector<16x32xf32>
    %54 = arith.mulf %43, %53 : vector<16x32xf32>
    %55 = vector.broadcast %9 : vector<1x32xf32> to vector<16x32xf32>
    %56 = arith.addf %54, %55 : vector<16x32xf32>
    %cst_24 = arith.constant 0.000000e+00 : f32
    %57 = vector.broadcast %cst_24 : f32 to vector<16x32xf32>
    %58 = arith.maximumf %56, %57 : vector<16x32xf32>
    %cst_25 = arith.constant dense<0.000000e+00> : vector<16x4xf32>
    %59 = tpu.matmul %58, %3, %cst_25 {dimension_numbers = #tpu.dot_dimension_numbers<[1], [0], [0], [1], [0, 0, 1, 1], [], []>} : vector<16x32xf32>, vector<32x4xf32>, vector<16x4xf32> -> vector<16x4xf32>
    %60 = vector.broadcast %10 : vector<1x4xf32> to vector<16x4xf32>
    %61 = arith.addf %59, %60 : vector<16x4xf32>
    %cst_26 = arith.constant dense<0xFF800000> : vector<16xf32>
    %62 = vector.multi_reduction <maximumf>, %61, %cst_26 [1] : vector<16x4xf32> to vector<16xf32>
    %63 = vector.shape_cast %62 : vector<16xf32> to vector<16x1xf32>
    %64 = vector.broadcast %63 : vector<16x1xf32> to vector<16x4xf32>
    %65 = arith.subf %61, %64 : vector<16x4xf32>
    %66 = math.exp %65 : vector<16x4xf32>
    %cst_27 = arith.constant dense<0.000000e+00> : vector<16xf32>
    %67 = vector.multi_reduction <add>, %66, %cst_27 [1] : vector<16x4xf32> to vector<16xf32>
    %68 = vector.shape_cast %67 : vector<16xf32> to vector<16x1xf32>
    %69 = tpu.reciprocal %68 : vector<16x1xf32> -> vector<16x1xf32>
    %70 = vector.broadcast %69 : vector<16x1xf32> to vector<16x4xf32>
    %71 = arith.mulf %66, %70 : vector<16x4xf32>
    %c0_28 = arith.constant 0 : index
    %c0_29 = arith.constant 0 : index
    %72 = vector.load %arg3[%c0_28, %c0_29] : memref<16x4xf32, #tpu.memory_space<vmem>>, vector<16x4xf32>
    tpu.vector_store %arg3[%c0_28, %c0_29], %71 {strides = array<i32>} : memref<16x4xf32, #tpu.memory_space<vmem>>, vector<16x4xf32>,
    %73 = math.log %68 : vector<16x1xf32>
    %74 = arith.addf %63, %73 : vector<16x1xf32>
    %75 = vector.extract_strided_slice %0 {offsets = [0, 3], sizes = [16, 1], strides = [1, 1]} : vector<16x9xf32> to vector<16x1xf32>
    %76 = arith.fptosi %75 : vector<16x1xf32> to vector<16x1xi32>
    %77 = tpu.iota {dimensions = array<i32: 1>} : vector<16x4xi32>
    %78 = vector.broadcast %76 : vector<16x1xi32> to vector<16x4xi32>
    %79 = arith.cmpi eq, %77, %78 : vector<16x4xi32>
    %cst_30 = arith.constant 0.000000e+00 : f32
    %80 = vector.broadcast %cst_30 : f32 to vector<16x4xf32>
    %81 = arith.select %79, %61, %80 : vector<16x4xi1>, vector<16x4xf32>
    %cst_31 = arith.constant dense<0.000000e+00> : vector<16xf32>
    %82 = vector.multi_reduction <add>, %81, %cst_31 [1] : vector<16x4xf32> to vector<16xf32>
    %83 = vector.shape_cast %82 : vector<16xf32> to vector<16x1xf32>
    %84 = arith.subf %74, %83 : vector<16x1xf32>
    %85 = vector.shape_cast %84 : vector<16x1xf32> to vector<1x16x1xf32>
    %cst_32 = arith.constant dense<0.000000e+00> : vector<1xf32>
    %86 = vector.multi_reduction <add>, %85, %cst_32 [1, 2] : vector<1x16x1xf32> to vector<1xf32>
    %87 = vector.shape_cast %86 : vector<1xf32> to vector<1x1x1xf32>
    %88 = vector.extract %87[0, 0, 0] : f32 from vector<1x1x1xf32>
    %cst_33 = arith.constant 6.250000e-02 : f32
    %89 = arith.mulf %88, %cst_33 : f32
    %90 = vector.broadcast %89 : f32 to vector<8x128xf32>
    %c0_34 = arith.constant 0 : index
    %c0_35 = arith.constant 0 : index
    %91 = vector.load %arg4[%c0_34, %c0_35] : memref<8x128xf32, #tpu.memory_space<vmem>>, vector<8x128xf32>
    tpu.vector_store %arg4[%c0_34, %c0_35], %90 {strides = array<i32>} : memref<8x128xf32, #tpu.memory_space<vmem>>, vector<8x128xf32>,
    return
  }
  func.func @transform_0(%arg0: i32) -> (i32, i32) {
    %c0_i32 = arith.constant 0 : i32
    %c0_i32_0 = arith.constant 0 : i32
    return %arg0, %c0_i32 : i32, i32
  }
  func.func @transform_1(%arg0: i32) -> (i32, i32) {
    %c0_i32 = arith.constant 0 : i32
    %c0_i32_0 = arith.constant 0 : i32
    %c0_i32_1 = arith.constant 0 : i32
    return %c0_i32, %c0_i32_0 : i32, i32
  }
  func.func @transform_2(%arg0: i32) -> (i32, i32) {
    %c0_i32 = arith.constant 0 : i32
    %c0_i32_0 = arith.constant 0 : i32
    return %arg0, %c0_i32 : i32, i32
  }
  func.func @transform_3(%arg0: i32) -> (i32, i32) {
    %c0_i32 = arith.constant 0 : i32
    %c0_i32_0 = arith.constant 0 : i32
    return %arg0, %c0_i32 : i32, i32
  }
}

</mosaic_0001>

<llo_original>
// kernel: tpu_custom_call.1
$region0: #{tpu_custom_call.1}
  #allocation0 [shape = 'u32[]', space=smem, size = 0x4, offset = 0x4, fixed_abs, tag = 'smem constant byte address 0x4 - core index']
  #allocation1 [shape = 'u32[144,128]{1,0:T(1,128)}', space=vmem, size = 0x12000, scoped, tag = 'internal scratch']
  %s0 = inlined_call_operand.vmem [shape: f32[64,9], index: 0, kind: input, shape index: {}]
  %s1 = inlined_call_operand.vmem [shape: f32[88,32], index: 1, kind: input, shape index: {}]
  %s2 = inlined_call_operand.vmem [shape: f32[64,4], index: 2, kind: output, shape index: {0}]
  %s3 = inlined_call_operand.hbm [shape: f32[32,128], index: 3, kind: output, shape index: {1}]
  %4 = xla_tuple %s2, %s3
  %s5 = sld [smem:[#allocation0]]
  $region49: #{tpu_custom_call.1} parent=0
    _
  %s7 = ssub.s32 1, %s5
  %s8 = scalar_select 0, %s7, %s5
  $region1: #{tpu_custom_call.1} parent=0
    #allocation2 [shape = 'u8[8192]{0}', space=vmem, size = 0x2000, scoped, tag = 'output window, operand 1']
    #allocation3 [shape = 's32[2]{0}', space=sflag, size = 0x8, scoped, tag = 'scoped memory for tpu_custom_call.1']
    %9 = vsyncpa [#allocation3], 0
    %s10 = scalar_lea.sflag [#allocation3], 1
    %11 = vsyncpa %s10, 0
    loop: start=0, step=1, limit=6
    $region2: #{tpu_custom_call.1} parent=1 // loop_pre_header
      _
    $region3: #{tpu_custom_call.1} parent=1 // loop_header
      %s13 = sphi 0, %s17
      %p14 = scmp.ge.s32.totalorder %s13, 6
      %s23 = sphi 0, %s25
      %s26 = sphi 0, %s23
      %s27 = sphi 0, %s26
      %s43 = sphi 0, %s27
      %s47 = sphi 0, %s47
      %s49 = sphi 0, %s47
      %s50 = sphi 0, %s49
      %s64 = sphi 0, %s50
      %s70 = sphi 0, %s72
      %s73 = sphi 0, %s70
      %s74 = sphi 0, %s73
      %s90 = sphi 0, %s74
      %s96 = sphi 0, %s98
      %s99 = sphi 0, %s96
      %s100 = sphi 0, %s99
      %s116 = sphi 0, %s100
    $region4: #{tpu_custom_call.1} parent=1 // loop_header_branch
      %16 = sbr.rel (%p14) target = $region8
    $region5: #{tpu_custom_call.1} parent=1 // loop_body
      %s18 = ssub.s32 %s13, 1
      %s19 = ssub.s32 %s13, 2
      %s20 = sadd.s32 %s13, 1
      %s21 = ssub.s32 %s13, %s20
      %p22 = scmp.eq.s32.totalorder %s21, 0
      %s24 = sadd.s32 %s23, 1
      %s25 = scalar_select %p22, %s23, %s24
      %p28 = pneg %p22
      %p29 = scmp.eq.s32.totalorder %s13, 3
      %p30 = por %p28, %p29
      %p31 = scmp.ne.s32.totalorder %s23, %s26
      %p32 = scmp.eq.s32.totalorder %s13, 0
      %p33 = por %p31, %p32
      %p34 = scmp.ne.s32.totalorder %s23, %s26
      %p35 = scmp.eq.s32.totalorder %s18, 3
      %p36 = por %p34, %p35
      %p37 = scmp.ne.s32.totalorder %s26, %s27
      %p38 = scmp.eq.s32.totalorder %s18, 0
      %p39 = por %p37, %p38
      %p40 = scmp.ne.s32.totalorder %s26, %s27
      %p41 = scmp.eq.s32.totalorder %s19, 3
      %p42 = por %p40, %p41
      %p44 = scmp.ne.s32.totalorder %s27, %s43
      %p45 = scmp.eq.s32.totalorder %s19, 0
      %p46 = por %p44, %p45
      %s48 = sadd.s32 %s47, 1
      %p51 = scmp.eq.s32.totalorder %s13, 3
      %p52 = scmp.ne.s32.totalorder %s47, %s49
      %p53 = scmp.eq.s32.totalorder %s13, 0
      %p54 = por %p52, %p53
      %p55 = scmp.ne.s32.totalorder %s47, %s49
      %p56 = scmp.eq.s32.totalorder %s18, 3
      %p57 = por %p55, %p56
      %p58 = scmp.ne.s32.totalorder %s49, %s50
      %p59 = scmp.eq.s32.totalorder %s18, 0
      %p60 = por %p58, %p59
      %p61 = scmp.ne.s32.totalorder %s49, %s50
      %p62 = scmp.eq.s32.totalorder %s19, 3
      %p63 = por %p61, %p62
      %p65 = scmp.ne.s32.totalorder %s50, %s64
      %p66 = scmp.eq.s32.totalorder %s19, 0
      %p67 = por %p65, %p66
      %s68 = ssub.s32 %s13, %s20
      %p69 = scmp.eq.s32.totalorder %s68, 0
      %s71 = sadd.s32 %s70, 1
      %s72 = scalar_select %p69, %s70, %s71
      %p75 = pneg %p69
      %p76 = scmp.eq.s32.totalorder %s13, 3
      %p77 = por %p75, %p76
      %p78 = scmp.ne.s32.totalorder %s70, %s73
      %p79 = scmp.eq.s32.totalorder %s13, 0
      %p80 = por %p78, %p79
      %p81 = scmp.ne.s32.totalorder %s70, %s73
      %p82 = scmp.eq.s32.totalorder %s18, 3
      %p83 = por %p81, %p82
      %p84 = scmp.ne.s32.totalorder %s73, %s74
      %p85 = scmp.eq.s32.totalorder %s18, 0
      %p86 = por %p84, %p85
      %p87 = scmp.ne.s32.totalorder %s73, %s74
      %p88 = scmp.eq.s32.totalorder %s19, 3
      %p89 = por %p87, %p88
      %p91 = scmp.ne.s32.totalorder %s74, %s90
      %p92 = scmp.eq.s32.totalorder %s19, 0
      %p93 = por %p91, %p92
      %s94 = ssub.s32 %s13, %s20
      %p95 = scmp.eq.s32.totalorder %s94, 0
      %s97 = sadd.s32 %s96, 1
      %s98 = scalar_select %p95, %s96, %s97
      %p101 = pneg %p95
      %p102 = scmp.eq.s32.totalorder %s13, 3
      %p103 = por %p101, %p102
      %p104 = scmp.ne.s32.totalorder %s96, %s99
      %p105 = scmp.eq.s32.totalorder %s13, 0
      %p106 = por %p104, %p105
      %p107 = scmp.ne.s32.totalorder %s96, %s99
      %p108 = scmp.eq.s32.totalorder %s18, 3
      %p109 = por %p107, %p108
      %p110 = scmp.ne.s32.totalorder %s99, %s100
      %p111 = scmp.eq.s32.totalorder %s18, 0
      %p112 = por %p110, %p111
      %p113 = scmp.ne.s32.totalorder %s99, %s100
      %p114 = scmp.eq.s32.totalorder %s19, 3
      %p115 = por %p113, %p114
      %p117 = scmp.ne.s32.totalorder %s100, %s116
      %p118 = scmp.eq.s32.totalorder %s19, 0
      %p119 = por %p117, %p118
      %p120 = scmp.le.s32.totalorder 1, %s13
      %p121 = scmp.lt.s32.totalorder %s13, 5
      %p122 = pnand %p120, %p121
      %p123 = pneg %p122
      // Predicated region
      $region9: #{tpu_custom_call.1} parent=5 // pred_check
        _
      $region10: #{tpu_custom_call.1} parent=5 // pred_check_branch
        %125 = sbr.rel (%p122) target = $region12
      $region11: #{tpu_custom_call.1} parent=5 // pred_region
        %s126 = ssub.s32 %s13, 1
        // Predicated region
        $region13: #{tpu_custom_call.1} parent=11 // pred_check
          %p127 = pneg %p60
        $region14: #{tpu_custom_call.1} parent=11 // pred_check_branch
          %129 = sbr.rel (%p127) target = $region16
        $region15: #{tpu_custom_call.1} parent=11 // pred_region
          _
        $region16: #{tpu_custom_call.1} parent=11 // pred_fallthru
          _
      $region12: #{tpu_custom_call.1} parent=5 // pred_fallthru
        _
      %p130 = scmp.lt.s32.totalorder %s13, 4
      // Predicated region
      $region17: #{tpu_custom_call.1} parent=5 // pred_check
        %p131 = pneg %p130
      $region18: #{tpu_custom_call.1} parent=5 // pred_check_branch
        %133 = sbr.rel (%p131) target = $region20
      $region19: #{tpu_custom_call.1} parent=5 // pred_region
        // Predicated region
        $region21: #{tpu_custom_call.1} parent=19 // pred_check
          %p134 = pneg %p33
        $region22: #{tpu_custom_call.1} parent=19 // pred_check_branch
          %136 = sbr.rel (%p134) target = $region24
        $region23: #{tpu_custom_call.1} parent=19 // pred_region
          %s137 = smul.u32 2, %s13
          %p138 = scmp.lt.s32.totalorder %s137, 7
          %s139 = scalar_select %p138, %s137, 7
          %s140 = smul.addr %s139, 8
          %s141 = scalar_lea.vmem %s0, %s140
          %s142 = smul.u32 2, %s13
        $region24: #{tpu_custom_call.1} parent=19 // pred_fallthru
          _
      $region20: #{tpu_custom_call.1} parent=5 // pred_fallthru
        _
      %p143 = scmp.le.s32.totalorder 1, %s13
      %p144 = scmp.lt.s32.totalorder %s13, 5
      %p145 = pnand %p143, %p144
      %p146 = pneg %p145
      // Predicated region
      $region25: #{tpu_custom_call.1} parent=5 // pred_check
        _
      $region26: #{tpu_custom_call.1} parent=5 // pred_check_branch
        %148 = sbr.rel (%p145) target = $region28
      $region27: #{tpu_custom_call.1} parent=5 // pred_region
        %s149 = ssub.s32 %s13, 1
        %s150 = smul.u32 2, %s18
        %p151 = scmp.lt.s32.totalorder %s150, 7
        %s152 = scalar_select %p151, %s150, 7
        %s153 = smul.addr %s152, 8
        %s154 = scalar_lea.vmem %s0, %s153
        %p155 = pneg %p39
        %p156 = pneg %p36
        %p157 = pneg %p60
        %p158 = pneg %p57
        %p159 = pneg %p86
        %p160 = pneg %p83
        %s161 = smul.u32 2, %s18
        %p162 = scmp.lt.s32.totalorder %s161, 7
        %s163 = scalar_select %p162, %s161, 7
        %s164 = smul.addr %s163, 8
        %s165 = scalar_lea.vmem %s2, %s164
        %p166 = pneg %p112
        %p167 = pneg %p109
        %s168 = sand.u32 %s99, 1
        %s169 = scalar_lea.sflag [#allocation3], %s168
        %s170 = sand.u32 %s99, 1
        %s171 = smul.addr %s170, 8
        %s172 = scalar_lea.vmem [#allocation2], %s171
        %s173 = smul.u32 2, %s18
        %p174 = scmp.lt.s32.totalorder %s173, 7
        %s175 = scalar_select %p174, %s173, 7
        %s176 = smul.addr %s175, 8
        %s177 = scalar_lea.vmem %s0, %s176
        %s178 = smul.u32 2, %s18
        %s179 = smul.u32 2, %s18
        %p180 = scmp.lt.s32.totalorder %s179, 7
        %s181 = scalar_select %p180, %s179, 7
        %s182 = smul.addr %s181, 8
        %s183 = scalar_lea.vmem %s2, %s182
        %s184 = smul.u32 2, %s18
        %v185 = vld [vmem:[%s177] sm:$0xff]
        %v186 = vld [vmem:[%s177 + $0x8] sm:$0xff]
        %v187 = vld [vmem:[%s1] sm:$0xff]
        %v188 = vld [vmem:[%s1 + $0x8] sm:$0x1]
        %v189 = vld [vmem:[%s1 + $0x10] sm:$0xff]
        %v190 = vld [vmem:[%s1 + $0x18] sm:$0xff]
        %v191 = vld [vmem:[%s1 + $0x20] sm:$0xff]
        %v192 = vld [vmem:[%s1 + $0x28] sm:$0xff]
        %v193 = vld [vmem:[%s1 + $0x30] sm:$0xff]
        %v194 = vld [vmem:[%s1 + $0x38] sm:$0xff]
        %v195 = vld [vmem:[%s1 + $0x40] sm:$0xff]
        %v196 = vld [vmem:[%s1 + $0x48] sm:$0xff]
        %v197 = vld [vmem:[%s1 + $0x50] sm:$0x1]
        %v198 = vld [vmem:[%s1 + $0x51] sm:$0x1]
        %v199 = vld [vmem:[%s1 + $0x52] sm:$0x1]
        %v200 = vld [vmem:[%s1 + $0x53] sm:$0x1]
        %v201 = vld [vmem:[%s1 + $0x54] sm:$0x1]
        %v202 = vld [vmem:[%s1 + $0x55] sm:$0x1]
        %v203 = vld [vmem:[%s1 + $0x56] sm:$0x1]
        %v204 = vlaneseq
        %v205 = vshrl.u32 %v204, 7
        %v206 = vsub.s32 0, %v205
        %v207 = vrot.slane %v197, %v206
        %vm208 = vcmask 72704
        %v210 = vsel %vm208, %v185, 0
        %v213 = vsel %vm208, %v186, 0
        %vm215 = vcmask 1040384
        %v217 = vsel %vm215, %v188, 0
        %219 = vmatprep.subr.mxu0 0.0
        %220 = vmatpush1.msra.mxu0 %v187
        %221 = vmatprep.subr.mxu0 0.0
        %222 = vmatpush1.msra.mxu0 %v217
        %223 = vmatprep.subr.mxu0 0.0
        %224 = vmatpush1.msra.mxu0 0.0
        %225 = vmatprep.subr.mxu0 0.0
        %226 = vmatpush1.msra.mxu0 0.0
        %227 = vmatprep.subr.mxu0 0.0
        %228 = vmatpush1.msra.mxu0 0.0
        %229 = vmatprep.subr.mxu0 0.0
        %230 = vmatpush1.msra.mxu0 0.0
        %231 = vmatprep.subr.mxu0 0.0
        %232 = vmatpush1.msra.mxu0 0.0
        %233 = vmatprep.subr.mxu0 0.0
        %234 = vmatpush1.msra.mxu0 0.0
        %235 = vmatprep.subr.mxu0 0.0
        %236 = vmatpush1.msra.mxu0 0.0
        %237 = vmatprep.subr.mxu0 0.0
        %238 = vmatpush1.msra.mxu0 0.0
        %239 = vmatprep.subr.mxu0 0.0
        %240 = vmatpush1.msra.mxu0 0.0
        %241 = vmatprep.subr.mxu0 0.0
        %242 = vmatpush1.msra.mxu0 0.0
        %243 = vmatprep.subr.mxu0 0.0
        %244 = vmatpush1.msra.mxu0 0.0
        %245 = vmatprep.subr.mxu0 0.0
        %246 = vmatpush1.msra.mxu0 0.0
        %247 = vmatprep.subr.mxu0 0.0
        %248 = vmatpush1.msra.mxu0 0.0
        %249 = vmatprep.subr.mxu0 0.0
        %250 = vmatpush1.msra.mxu0 0.0
        %251 = vmatprep.subr.mxu0 0.0
        %252 = vmatpush1.msra.mxu0 0.0
        %253 = vmatprep.subr.mxu0 0.0
        %254 = vmatpush1.msra.mxu0 0.0
        %255 = vmatprep.subr.mxu0 0.0
        %256 = vmatpush1.msra.mxu0 0.0
        %257 = vmatprep.subr.mxu0 0.0
        %258 = vmatpush1.msra.mxu0 0.0
        %259 = vmatprep.subr.mxu0 0.0
        %260 = vmatpush1.msra.mxu0 0.0
        %261 = vmatprep.subr.mxu0 0.0
        %262 = vmatpush1.msra.mxu0 0.0
        %263 = vmatprep.subr.mxu0 0.0
        %264 = vmatpush1.msra.mxu0 0.0
        %265 = vmatprep.subr.mxu0 0.0
        %266 = vmatpush1.msra.mxu0 0.0
        %267 = vmatprep.subr.mxu0 0.0
        %268 = vmatpush1.msra.mxu0 0.0
        %269 = vmatprep.subr.mxu0 0.0
        %270 = vmatpush1.msra.mxu0 0.0
        %271 = vmatprep.subr.mxu0 0.0
        %272 = vmatpush1.msra.mxu0 0.0
        %273 = vmatprep.subr.mxu0 0.0
        %274 = vmatpush1.msra.mxu0 0.0
        %275 = vmatprep.subr.mxu0 0.0
        %276 = vmatpush1.msra.mxu0 0.0
        %277 = vmatprep.subr.mxu0 0.0
        %278 = vmatpush1.msra.mxu0 0.0
        %279 = vmatprep.subr.mxu0 0.0
        %280 = vmatpush1.msra.mxu0 0.0
        %281 = vmatprep.subr.mxu0 0.0
        %282 = vmatpush1.msra.mxu0 0.0
        %283 = vmatprep.mubr.f32.mxu0 0.0
        %284 = vmatmul.mubr.f32.gmra.mrb[0].mxu0 %v210
        %v285 = vpop.f32.mrb[0].mxu0
        %v286 = vadd.f32 %v207, %v285
        %v287 = vpop.f32.mrb[0].mxu0
        %288 = vmatprep.mubr.f32.mxu0 0.0
        %289 = vmatmul.mubr.f32.gmra.mrb[0].mxu0 %v213
        %v290 = vpop.f32.mrb[0].mxu0
        %v291 = vadd.f32 %v207, %v290
        %v292 = vpop.f32.mrb[0].mxu0
        %293 = vdwg.mxu0
        %vm294 = vcmask 261120
        %v295 = vsel %vm294, %v286, 0.0
        %v296 = vsel %vm294, %v291, 0.0
        %v297 = vadd.f32 %v295, %v296
        %v298 = vrot.slane %v297, 4
        %v299 = vadd.f32 %v297, %v298
        %v300 = vrot.slane %v299, 2
        %v301 = vadd.f32 %v299, %v300
        %v302 = vrot.slane %v301, 1
        %v303 = vadd.f32 %v301, %v302
        %v304 = vrcp.pop 16.0
        %v305 = vmul.f32 %v303, %v304
        %v306 = vsub.f32 %v286, %v305
        %v307 = vsub.f32 %v291, %v305
        %v308 = vmul.f32 %v306, %v306
        %v309 = vmul.f32 %v307, %v307
        %v310 = vsel %vm294, %v308, 0.0
        %v311 = vsel %vm294, %v309, 0.0
        %v312 = vadd.f32 %v310, %v311
        %v313 = vrot.slane %v312, 4
        %v314 = vadd.f32 %v312, %v313
        %v315 = vrot.slane %v314, 2
        %v316 = vadd.f32 %v314, %v315
        %v317 = vrot.slane %v316, 1
        %v318 = vadd.f32 %v316, %v317
        %v319 = vmul.f32 %v318, %v304
        %v320 = vadd.f32 %v319, 1e-05
        %v321 = vrsqrt.pop %v320
        %v322 = vmul.f32 %v198, %v321
        %v323 = vlaneseq
        %v324 = vshrl.u32 %v323, 7
        %v325 = vsub.s32 0, %v324
        %v326 = vrot.slane %v322, %v325
        %v327 = vmul.f32 %v306, %v326
        %v328 = vmul.f32 %v307, %v326
        %v329 = vlaneseq
        %v330 = vshrl.u32 %v329, 7
        %v331 = vsub.s32 0, %v330
        %v332 = vrot.slane %v199, %v331
        %v333 = vadd.f32 %v327, %v332
        %v334 = vadd.f32 %v328, %v332
        %v335 = vmax.f32 %v333, 0.0
        %v336 = vmax.f32 %v334, 0.0
        %v337 = vlaneseq
        %v338 = vshrl.u32 %v337, 7
        %v339 = vsub.s32 0, %v338
        %v340 = vrot.slane %v200, %v339
        %v342 = vsel %vm294, %v335, 0
        %v345 = vsel %vm294, %v336, 0
        %347 = vmatprep.subr.mxu0 0.0
        %348 = vmatpush1.msra.mxu0 %v189
        %349 = vmatprep.subr.mxu0 0.0
        %350 = vmatpush1.msra.mxu0 %v190
        %351 = vmatprep.subr.mxu0 0.0
        %352 = vmatpush1.msra.mxu0 %v191
        %353 = vmatprep.subr.mxu0 0.0
        %354 = vmatpush1.msra.mxu0 %v192
        %355 = vmatprep.subr.mxu0 0.0
        %356 = vmatpush1.msra.mxu0 0.0
        %357 = vmatprep.subr.mxu0 0.0
        %358 = vmatpush1.msra.mxu0 0.0
        %359 = vmatprep.subr.mxu0 0.0
        %360 = vmatpush1.msra.mxu0 0.0
        %361 = vmatprep.subr.mxu0 0.0
        %362 = vmatpush1.msra.mxu0 0.0
        %363 = vmatprep.subr.mxu0 0.0
        %364 = vmatpush1.msra.mxu0 0.0
        %365 = vmatprep.subr.mxu0 0.0
        %366 = vmatpush1.msra.mxu0 0.0
        %367 = vmatprep.subr.mxu0 0.0
        %368 = vmatpush1.msra.mxu0 0.0
        %369 = vmatprep.subr.mxu0 0.0
        %370 = vmatpush1.msra.mxu0 0.0
        %371 = vmatprep.subr.mxu0 0.0
        %372 = vmatpush1.msra.mxu0 0.0
        %373 = vmatprep.subr.mxu0 0.0
        %374 = vmatpush1.msra.mxu0 0.0
        %375 = vmatprep.subr.mxu0 0.0
        %376 = vmatpush1.msra.mxu0 0.0
        %377 = vmatprep.subr.mxu0 0.0
        %378 = vmatpush1.msra.mxu0 0.0
        %379 = vmatprep.subr.mxu0 0.0
        %380 = vmatpush1.msra.mxu0 0.0
        %381 = vmatprep.subr.mxu0 0.0
        %382 = vmatpush1.msra.mxu0 0.0
        %383 = vmatprep.subr.mxu0 0.0
        %384 = vmatpush1.msra.mxu0 0.0
        %385 = vmatprep.subr.mxu0 0.0
        %386 = vmatpush1.msra.mxu0 0.0
        %387 = vmatprep.subr.mxu0 0.0
        %388 = vmatpush1.msra.mxu0 0.0
        %389 = vmatprep.subr.mxu0 0.0
        %390 = vmatpush1.msra.mxu0 0.0
        %391 = vmatprep.subr.mxu0 0.0
        %392 = vmatpush1.msra.mxu0 0.0
        %393 = vmatprep.subr.mxu0 0.0
        %394 = vmatpush1.msra.mxu0 0.0
        %395 = vmatprep.subr.mxu0 0.0
        %396 = vmatpush1.msra.mxu0 0.0
        %397 = vmatprep.subr.mxu0 0.0
        %398 = vmatpush1.msra.mxu0 0.0
        %399 = vmatprep.subr.mxu0 0.0
        %400 = vmatpush1.msra.mxu0 0.0
        %401 = vmatprep.subr.mxu0 0.0
        %402 = vmatpush1.msra.mxu0 0.0
        %403 = vmatprep.subr.mxu0 0.0
        %404 = vmatpush1.msra.mxu0 0.0
        %405 = vmatprep.subr.mxu0 0.0
        %406 = vmatpush1.msra.mxu0 0.0
        %407 = vmatprep.subr.mxu0 0.0
        %408 = vmatpush1.msra.mxu0 0.0
        %409 = vmatprep.subr.mxu0 0.0
        %410 = vmatpush1.msra.mxu0 0.0
        %411 = vmatprep.mubr.f32.mxu0 0.0
        %412 = vmatmul.mubr.f32.gmra.mrb[0].mxu0 %v342
        %v413 = vpop.f32.mrb[0].mxu0
        %v414 = vadd.f32 %v340, %v413
        %v415 = vpop.f32.mrb[0].mxu0
        %416 = vmatprep.mubr.f32.mxu0 0.0
        %417 = vmatmul.mubr.f32.gmra.mrb[0].mxu0 %v345
        %v418 = vpop.f32.mrb[0].mxu0
        %v419 = vadd.f32 %v340, %v418
        %v420 = vpop.f32.mrb[0].mxu0
        %421 = vdwg.mxu0
        %v422 = vsel %vm294, %v414, 0.0
        %v423 = vsel %vm294, %v419, 0.0
        %v424 = vadd.f32 %v422, %v423
        %v425 = vrot.slane %v424, 4
        %v426 = vadd.f32 %v424, %v425
        %v427 = vrot.slane %v426, 2
        %v428 = vadd.f32 %v426, %v427
        %v429 = vrot.slane %v428, 1
        %v430 = vadd.f32 %v428, %v429
        %v431 = vmul.f32 %v430, %v304
        %v432 = vsub.f32 %v414, %v431
        %v433 = vsub.f32 %v419, %v431
        %v434 = vmul.f32 %v432, %v432
        %v435 = vmul.f32 %v433, %v433
        %v436 = vsel %vm294, %v434, 0.0
        %v437 = vsel %vm294, %v435, 0.0
        %v438 = vadd.f32 %v436, %v437
        %v439 = vrot.slane %v438, 4
        %v440 = vadd.f32 %v438, %v439
        %v441 = vrot.slane %v440, 2
        %v442 = vadd.f32 %v440, %v441
        %v443 = vrot.slane %v442, 1
        %v444 = vadd.f32 %v442, %v443
        %v445 = vmul.f32 %v444, %v304
        %v446 = vadd.f32 %v445, 1e-05
        %v447 = vrsqrt.pop %v446
        %v448 = vmul.f32 %v201, %v447
        %v449 = vlaneseq
        %v450 = vshrl.u32 %v449, 7
        %v451 = vsub.s32 0, %v450
        %v452 = vrot.slane %v448, %v451
        %v453 = vmul.f32 %v432, %v452
        %v454 = vmul.f32 %v433, %v452
        %v455 = vlaneseq
        %v456 = vshrl.u32 %v455, 7
        %v457 = vsub.s32 0, %v456
        %v458 = vrot.slane %v202, %v457
        %v459 = vadd.f32 %v453, %v458
        %v460 = vadd.f32 %v454, %v458
        %v461 = vmax.f32 %v459, 0.0
        %v462 = vmax.f32 %v460, 0.0
        %v463 = vlaneseq
        %v464 = vshrl.u32 %v463, 7
        %v465 = vsub.s32 0, %v464
        %v466 = vrot.slane %v203, %v465
        %v468 = vsel %vm294, %v461, 0
        %v471 = vsel %vm294, %v462, 0
        %473 = vmatprep.subr.mxu0 0.0
        %474 = vmatpush1.msra.mxu0 %v193
        %475 = vmatprep.subr.mxu0 0.0
        %476 = vmatpush1.msra.mxu0 %v194
        %477 = vmatprep.subr.mxu0 0.0
        %478 = vmatpush1.msra.mxu0 %v195
        %479 = vmatprep.subr.mxu0 0.0
        %480 = vmatpush1.msra.mxu0 %v196
        %481 = vmatprep.subr.mxu0 0.0
        %482 = vmatpush1.msra.mxu0 0.0
        %483 = vmatprep.subr.mxu0 0.0
        %484 = vmatpush1.msra.mxu0 0.0
        %485 = vmatprep.subr.mxu0 0.0
        %486 = vmatpush1.msra.mxu0 0.0
        %487 = vmatprep.subr.mxu0 0.0
        %488 = vmatpush1.msra.mxu0 0.0
        %489 = vmatprep.subr.mxu0 0.0
        %490 = vmatpush1.msra.mxu0 0.0
        %491 = vmatprep.subr.mxu0 0.0
        %492 = vmatpush1.msra.mxu0 0.0
        %493 = vmatprep.subr.mxu0 0.0
        %494 = vmatpush1.msra.mxu0 0.0
        %495 = vmatprep.subr.mxu0 0.0
        %496 = vmatpush1.msra.mxu0 0.0
        %497 = vmatprep.subr.mxu0 0.0
        %498 = vmatpush1.msra.mxu0 0.0
        %499 = vmatprep.subr.mxu0 0.0
        %500 = vmatpush1.msra.mxu0 0.0
        %501 = vmatprep.subr.mxu0 0.0
        %502 = vmatpush1.msra.mxu0 0.0
        %503 = vmatprep.subr.mxu0 0.0
        %504 = vmatpush1.msra.mxu0 0.0
        %505 = vmatprep.subr.mxu0 0.0
        %506 = vmatpush1.msra.mxu0 0.0
        %507 = vmatprep.subr.mxu0 0.0
        %508 = vmatpush1.msra.mxu0 0.0
        %509 = vmatprep.subr.mxu0 0.0
        %510 = vmatpush1.msra.mxu0 0.0
        %511 = vmatprep.subr.mxu0 0.0
        %512 = vmatpush1.msra.mxu0 0.0
        %513 = vmatprep.subr.mxu0 0.0
        %514 = vmatpush1.msra.mxu0 0.0
        %515 = vmatprep.subr.mxu0 0.0
        %516 = vmatpush1.msra.mxu0 0.0
        %517 = vmatprep.subr.mxu0 0.0
        %518 = vmatpush1.msra.mxu0 0.0
        %519 = vmatprep.subr.mxu0 0.0
        %520 = vmatpush1.msra.mxu0 0.0
        %521 = vmatprep.subr.mxu0 0.0
        %522 = vmatpush1.msra.mxu0 0.0
        %523 = vmatprep.subr.mxu0 0.0
        %524 = vmatpush1.msra.mxu0 0.0
        %525 = vmatprep.subr.mxu0 0.0
        %526 = vmatpush1.msra.mxu0 0.0
        %527 = vmatprep.subr.mxu0 0.0
        %528 = vmatpush1.msra.mxu0 0.0
        %529 = vmatprep.subr.mxu0 0.0
        %530 = vmatpush1.msra.mxu0 0.0
        %531 = vmatprep.subr.mxu0 0.0
        %532 = vmatpush1.msra.mxu0 0.0
        %533 = vmatprep.subr.mxu0 0.0
        %534 = vmatpush1.msra.mxu0 0.0
        %535 = vmatprep.subr.mxu0 0.0
        %536 = vmatpush1.msra.mxu0 0.0
        %537 = vmatprep.mubr.f32.mxu0 0.0
        %538 = vmatmul.mubr.f32.gmra.mrb[0].mxu0 %v468
        %v539 = vpop.f32.mrb[0].mxu0
        %v540 = vadd.f32 %v466, %v539
        %v541 = vpop.f32.mrb[0].mxu0
        %542 = vmatprep.mubr.f32.mxu0 0.0
        %543 = vmatmul.mubr.f32.gmra.mrb[0].mxu0 %v471
        %v544 = vpop.f32.mrb[0].mxu0
        %v545 = vadd.f32 %v466, %v544
        %v546 = vpop.f32.mrb[0].mxu0
        %547 = vdwg.mxu0
        %vm548 = vcmask 31744
        %v549 = vsel %vm548, %v540, -inf
        %550 = vmax.xlane.f32.xlu0 %v549
        %v551 = vpop.xlane.xlu0 %550
        %v552 = vsel %vm548, %v545, -inf
        %553 = vmax.xlane.f32.xlu0 %v552
        %v554 = vpop.xlane.xlu0 %553
        %v555 = vsub.f32 %v540, %v551
        %v556 = vsub.f32 %v545, %v554
        %v557 = vmul.f32 %v555, 1.442695
        %v558 = vpow.pop %v557
        %v559 = vmul.f32 %v556, 1.442695
        %v560 = vpow.pop %v559
        %v561 = vsel %vm548, %v558, 0.0
        %562 = vadd.xlane.f32.xlu0 %v561
        %v563 = vpop.xlane.xlu0 %562
        %v564 = vsel %vm548, %v560, 0.0
        %565 = vadd.xlane.f32.xlu0 %v564
        %v566 = vpop.xlane.xlu0 %565
        %v567 = vrcp.pop %v563
        %v568 = vrcp.pop %v566
        %v569 = vmul.f32 %v558, %v567
        %v570 = vmul.f32 %v560, %v568
        %571 = vst.msk [vmem:[%s183] sm:$0xff] %vm548, %v569
        %572 = vst.msk [vmem:[%s183 + $0x8] sm:$0xff] %vm548, %v570
        %v573 = vlog2.pop %v563
        %v574 = vmul.f32 %v573, 0.6931472
        %v575 = vlog2.pop %v566
        %v576 = vmul.f32 %v575, 0.6931472
        %v577 = vadd.f32 %v551, %v574
        %v578 = vadd.f32 %v554, %v576
        %v579 = vcvt.f32.s32.to.zero.pseudo %v185
        %v580 = vcvt.f32.s32.to.zero.pseudo %v186
        %v581 = vlaneseq
        %v582 = vand.u32 %v581, 127
        %583 = vset.pattern.permute.xlu0 3
        %584 = vperm.xlu0 %583, %v579
        %v585 = vpop.permute.xlu0 %584
        %586 = vset.pattern.permute.xlu0 3
        %587 = vperm.xlu0 %586, %v580
        %v588 = vpop.permute.xlu0 %587
        %vm589 = vcmp.eq.s32.totalorder %v582, %v585
        %vm590 = vcmp.eq.s32.totalorder %v582, %v588
        %v591 = vsel %vm589, %v540, 0.0
        %v592 = vsel %vm590, %v545, 0.0
        %v593 = vsel %vm548, %v591, 0.0
        %594 = vadd.xlane.f32.xlu0 %v593
        %v595 = vpop.xlane.xlu0 %594
        %v596 = vsel %vm548, %v592, 0.0
        %597 = vadd.xlane.f32.xlu0 %v596
        %v598 = vpop.xlane.xlu0 %597
        %v599 = vsub.f32 %v577, %v595
        %v600 = vsub.f32 %v578, %v598
        %vm601 = vcmask 7168
        %v602 = vsel %vm601, %v599, 0.0
        %v603 = vsel %vm601, %v600, 0.0
        %v604 = vadd.f32 %v602, %v603
        %605 = vadd.xlane.f32.xlu0 %v604
        %v606 = vpop.xlane.xlu0 %605
        %v607 = vrot.slane %v606, 4
        %v608 = vadd.f32 %v606, %v607
        %v609 = vrot.slane %v608, 2
        %v610 = vadd.f32 %v608, %v609
        %v611 = vrot.slane %v610, 1
        %v612 = vadd.f32 %v610, %v611
        %s613 = vtos %v612
        %s614 = smul.f32 %s613, 0.0625
        %v615 = vstv %s614
        %616 = vst [vmem:[%s172] sm:$0xff] %v615
        %s617 = smul.u32 2, %s18
        %p618 = scmp.lt.s32.totalorder %s617, 7
        %s619 = scalar_select %p618, %s617, 7
        %s620 = smul.addr %s619, 8
        %s621 = scalar_lea.vmem %s2, %s620
        %s622 = sand.u32 %s99, 1
        %s623 = scalar_lea.sflag [#allocation3], %s622
        %s624 = sand.u32 %s99, 1
        %s625 = smul.addr %s624, 8
        %s626 = scalar_lea.vmem [#allocation2], %s625
        // Predicated region
        $region29: #{tpu_custom_call.1} parent=27 // pred_check
          %p627 = pneg %p83
        $region30: #{tpu_custom_call.1} parent=27 // pred_check_branch
          %629 = sbr.rel (%p627) target = $region32
        $region31: #{tpu_custom_call.1} parent=27 // pred_region
          %s630 = smul.u32 2, %s18
        $region32: #{tpu_custom_call.1} parent=27 // pred_fallthru
          _
        // Predicated region
        $region33: #{tpu_custom_call.1} parent=27 // pred_check
          %p631 = pneg %p109
        $region34: #{tpu_custom_call.1} parent=27 // pred_check_branch
          %633 = sbr.rel (%p631) target = $region36
        $region35: #{tpu_custom_call.1} parent=27 // pred_region
          %s635 = ssub.s32 128, 128
          %636 = vsyncadd %s623, %s635
          %s637 = smul.addr %s18, 128
          %s638 = scalar_lea.hbm %s3, %s637
          %s640 = sshll.u32 %s626, 4
          %s641 = int_to_ptr.vmem [resolvable:$true] %s640
          %643 = dma.vmem_to_hbm [thread:$0]  %s641, 128, %s638, %s623
        $region36: #{tpu_custom_call.1} parent=27 // pred_fallthru
          _
      $region28: #{tpu_custom_call.1} parent=5 // pred_fallthru
        _
      %p644 = scmp.le.s32.totalorder 2, %s13
      // Predicated region
      $region37: #{tpu_custom_call.1} parent=5 // pred_check
        %p645 = pneg %p644
      $region38: #{tpu_custom_call.1} parent=5 // pred_check_branch
        %647 = sbr.rel (%p645) target = $region40
      $region39: #{tpu_custom_call.1} parent=5 // pred_region
        %s648 = ssub.s32 %s13, 2
        // Predicated region
        $region41: #{tpu_custom_call.1} parent=39 // pred_check
          %p649 = pneg %p89
        $region42: #{tpu_custom_call.1} parent=39 // pred_check_branch
          %651 = sbr.rel (%p649) target = $region44
        $region43: #{tpu_custom_call.1} parent=39 // pred_region
          %s652 = smul.u32 2, %s19
          %p653 = scmp.lt.s32.totalorder %s652, 7
          %s654 = scalar_select %p653, %s652, 7
          %s655 = smul.addr %s654, 8
          %s656 = scalar_lea.vmem %s2, %s655
        $region44: #{tpu_custom_call.1} parent=39 // pred_fallthru
          _
        // Predicated region
        $region45: #{tpu_custom_call.1} parent=39 // pred_check
          %p657 = pneg %p115
        $region46: #{tpu_custom_call.1} parent=39 // pred_check_branch
          %659 = sbr.rel (%p657) target = $region48
        $region47: #{tpu_custom_call.1} parent=39 // pred_region
          %s660 = sand.u32 %s100, 1
          %s661 = scalar_lea.sflag [#allocation3], %s660
          %s662 = sand.u32 %s100, 1
          %s663 = smul.addr %s662, 8
          %s664 = scalar_lea.vmem [#allocation2], %s663
          %665 = dma.done %s661, 128
        $region48: #{tpu_custom_call.1} parent=39 // pred_fallthru
          _
      $region40: #{tpu_custom_call.1} parent=5 // pred_fallthru
        _
    $region6: #{tpu_custom_call.1} parent=1 // loop_footer
      %s17 = sadd.s32 1, %s13
    $region7: #{tpu_custom_call.1} parent=1 // loop_footer_branch
      %12 = sbr.rel target = $region3
    $region8: #{tpu_custom_call.1} parent=1 // loop_exit
      _
    %666 = vsyncpa [#allocation3], 1
    %s667 = scalar_lea.sflag [#allocation3], 1
    %668 = vsyncpa %s667, 1

</llo_original>
